<compile_context>
chip_gen: v5e
topology: v5e:2x2
jax: 0.10.0
libtpu: 0.0.40
codegen_flags: <defaults>
</compile_context>

<pallas_src>
import math

import jax
import jax.numpy as jnp
from jax.experimental import pallas as pl
from jax.experimental.pallas import tpu as pltpu


def _sublane_multiple(dtype):
    # f32 -> 8, bf16 -> 16, int8/fp8 -> 32 (second-to-last dim packing).
    itemsize = jnp.dtype(dtype).itemsize
    return max(8, 32 // max(itemsize, 1))


def _pick_chunk(dim, target, align=128):
    """Largest multiple of `align` that divides `dim` and is <= target; else dim."""
    if dim <= target:
        return dim
    d = (target // align) * align
    while d >= align:
        if dim % d == 0:
            return d
        d -= align
    return dim


_INV_SQRT2 = 1.0 / math.sqrt(2.0)


def _gelu_exact(h):
    # Exact (erf-based) GELU in f32, matching torch.nn.GELU default.
    return 0.5 * h * (1.0 + jax.lax.erf(h * jnp.float32(_INV_SQRT2)))


# ---------------------------------------------------------------------------
# Plan A (resident): both weights live in VMEM, single-buffered.  The
# intermediate dim is chunked inside the kernel so the f32 GELU intermediate
# is only (tm, tI), letting up-proj MXU, erf VALU and down-proj MXU overlap.
# ---------------------------------------------------------------------------
def _make_resident_kernel(tI, n_chunks):

    def kernel(x_ref, wu_ref, bu_ref, wd_ref, bd_ref, o_ref):
        x = x_ref[...]
        tm = x.shape[0]
        H = wd_ref.shape[1]

        def chunk(off, acc):
            h = jnp.dot(x, wu_ref[:, pl.ds(off, tI)],
                        preferred_element_type=jnp.float32)
            h = h + bu_ref[:, pl.ds(off, tI)].astype(jnp.float32)
            h = _gelu_exact(h)
            return acc + jnp.dot(h.astype(wd_ref.dtype),
                                 wd_ref[pl.ds(off, tI), :],
                                 preferred_element_type=jnp.float32)

        acc = jnp.zeros((tm, H), jnp.float32)
        if n_chunks <= 8:
            for c in range(n_chunks):                 # static unroll
                acc = chunk(c * tI, acc)
        else:
            acc = jax.lax.fori_loop(
                0, n_chunks,
                lambda c, a: chunk(pl.multiple_of(c * tI, tI), a),
                acc)

        o_ref[...] = (acc + bd_ref[...].astype(jnp.float32)).astype(o_ref.dtype)

    return kernel


# ---------------------------------------------------------------------------
# Plan B (streamed): weights streamed as (H, tI)/(tI, H) tiles over a trailing
# "arbitrary" grid axis, f32 (tm, H) accumulator in VMEM scratch.
# ---------------------------------------------------------------------------
def _streamed_kernel(x_ref, wu_ref, bu_ref, wd_ref, bd_ref, o_ref, acc_ref):
    k = pl.program_id(1)

    @pl.when(k == 0)
    def _():
        acc_ref[...] = jnp.zeros_like(acc_ref)

    h = jnp.dot(x_ref[...], wu_ref[...], preferred_element_type=jnp.float32)
    h = h + bu_ref[...].astype(jnp.float32)
    h = _gelu_exact(h)
    acc_ref[...] += jnp.dot(h.astype(wd_ref.dtype), wd_ref[...],
                            preferred_element_type=jnp.float32)

    @pl.when(k == pl.num_programs(1) - 1)
    def _():
        o_ref[...] = (acc_ref[...]
                      + bd_ref[...].astype(jnp.float32)).astype(o_ref.dtype)


def bert_mlp_pallas(x, w_up, b_up, w_down, b_down, *, tm=256, plan=None, tI=None):
    """y = gelu(x @ w_up + b_up) @ w_down + b_down.

    x: [T, H]; w_up: [H, I]; b_up: [I]; w_down: [I, H]; b_down: [H].
    plan: None (auto) | "resident" | "streamed".  tI: optional streamed I-tile.
    """
    T, H = x.shape
    I = w_up.shape[1]
    assert w_up.shape == (H, I)
    assert w_down.shape == (I, H)
    assert b_up.shape == (I,) and b_down.shape == (H,)

    x_isz = jnp.dtype(x.dtype).itemsize
    w_isz = jnp.dtype(w_up.dtype).itemsize
    b_isz = jnp.dtype(b_up.dtype).itemsize

    # --- generation-aware VMEM ceiling (v7x: 64 MiB; v5e/v6e: 128 MiB) ------
    try:
        vmem_cap = int(pltpu.get_tpu_info().vmem_capacity_bytes)
    except Exception:
        vmem_cap = 128 * 1024 * 1024
    vmem_ceiling = int(vmem_cap * 0.85)

    # --- token tile: sublane-aligned; ragged T handled by Pallas edge blocks
    sub = _sublane_multiple(x.dtype)
    if T <= sub:
        tm = T                                   # full-dim block, always legal
    else:
        tm = max(sub, (min(tm, pl.cdiv(T, sub) * sub) // sub) * sub)
        if pl.cdiv(T, tm) < 2:                   # keep both v7x TCs busy
            tm = max(sub, pl.cdiv(T, 2 * sub) * sub)
    nt = pl.cdiv(T, tm)

    act_tiles = 4 * tm * H * x_isz               # x + out tiles, double-buffered

    # --- plan selection ------------------------------------------------------
    tI_res = I if tm * I * 4 <= (1 << 20) else _pick_chunk(I, 512)
    est_resident = int(1.2 * (2 * H * I * w_isz + (I + H) * b_isz + act_tiles
                              + 2 * tm * tI_res * 4 + tm * H * 4))

    def streamed_est(c):
        return int(1.2 * (4 * H * c * w_isz + (2 * c + H) * b_isz + act_tiles
                          + 2 * tm * c * 4 + tm * H * 4))

    def streamed_tile():
        if tI is not None and I % tI == 0 and (tI % 128 == 0 or tI == I):
            return tI
        for target in (1024, 512, 256, 128):
            cand = _pick_chunk(I, target)
            if streamed_est(cand) <= vmem_ceiling:
                return cand
        # TODO(synk): if I has no 128-aligned divisor and weights don't fit
        # resident, pad the weights once host-side instead of oversizing tiles.
        return _pick_chunk(I, 128)

    if plan == "resident":
        use_resident = True
    elif plan == "streamed":
        use_resident = False
    else:
        use_resident = est_resident <= vmem_ceiling

    b_up2 = b_up.reshape(1, I)
    b_down2 = b_down.reshape(1, H)

    cost = pl.CostEstimate(
        flops=4 * T * H * I,                      # two matmuls
        transcendentals=T * I,                    # erf
        bytes_accessed=2 * T * H * x_isz + 2 * H * I * w_isz + (I + H) * b_isz)

    if use_resident:
        vmem_limit = int(min(max(est_resident, 32 * 1024 * 1024), vmem_ceiling))
        resident = pl.Buffered(1)                 # constant block -> no 2x buffer
        out = pl.pallas_call(
            _make_resident_kernel(tI_res, I // tI_res),
            out_shape=jax.ShapeDtypeStruct((T, H), x.dtype),
            grid_spec=pltpu.PrefetchScalarGridSpec(
                num_scalar_prefetch=0,
                grid=(nt,),
                in_specs=[
                    pl.BlockSpec((tm, H), lambda i: (i, 0)),                  # x
                    pl.BlockSpec((H, I), lambda i: (0, 0), pipeline_mode=resident),
                    pl.BlockSpec((1, I), lambda i: (0, 0), pipeline_mode=resident),
                    pl.BlockSpec((I, H), lambda i: (0, 0), pipeline_mode=resident),
                    pl.BlockSpec((1, H), lambda i: (0, 0), pipeline_mode=resident),
                ],
                out_specs=pl.BlockSpec((tm, H), lambda i: (i, 0)),
            ),
            compiler_params=pltpu.CompilerParams(
                dimension_semantics=("parallel",),
                vmem_limit_bytes=vmem_limit),
            cost_estimate=cost,
        )(x, w_up, b_up2, w_down, b_down2)
    else:
        tI_s = streamed_tile()
        nk = I // tI_s
        vmem_limit = int(min(max(streamed_est(tI_s), 32 * 1024 * 1024),
                             vmem_ceiling))
        out = pl.pallas_call(
            _streamed_kernel,
            out_shape=jax.ShapeDtypeStruct((T, H), x.dtype),
            grid_spec=pltpu.PrefetchScalarGridSpec(
                num_scalar_prefetch=0,
                grid=(nt, nk),
                in_specs=[
                    pl.BlockSpec((tm, H), lambda i, k: (i, 0)),     # x (held per i)
                    pl.BlockSpec((H, tI_s), lambda i, k: (0, k)),   # W_up tile
                    pl.BlockSpec((1, tI_s), lambda i, k: (0, k)),   # b_up tile
                    pl.BlockSpec((tI_s, H), lambda i, k: (k, 0)),   # W_down tile
                    pl.BlockSpec((1, H), lambda i, k: (0, 0),
                                 pipeline_mode=pl.Buffered(1)),     # b_down
                ],
                out_specs=pl.BlockSpec((tm, H), lambda i, k: (i, 0)),
                scratch_shapes=[pltpu.VMEM((tm, H), jnp.float32)],
            ),
            compiler_params=pltpu.CompilerParams(
                dimension_semantics=("parallel", "arbitrary"),
                vmem_limit_bytes=vmem_limit),
            cost_estimate=cost,
        )(x, w_up, b_up2, w_down, b_down2)

    return out


def bert_mlp_ref(x, w_up, b_up, w_down, b_down):
    h = x.astype(jnp.float32) @ w_up.astype(jnp.float32) + b_up.astype(jnp.float32)
    h = 0.5 * h * (1.0 + jax.lax.erf(h / jnp.sqrt(jnp.float32(2.0))))
    return h @ w_down.astype(jnp.float32) + b_down.astype(jnp.float32)


if __name__ == "__main__":
    # Small shapes: batch=2, seq=8 -> T=16 tokens, hidden=32, intermediate=64.
    batch, seq, hidden, intermediate = 2, 8, 32, 64
    T = batch * seq

    key = jax.random.PRNGKey(0)
    kx, ku, kbu, kd, kbd, ku2, kbu2, kd2, kbd2 = jax.random.split(key, 9)

    x = jax.random.normal(kx, (T, hidden), dtype=jnp.float32)
    # weights stored [in, out] (transposed vs. torch nn.Linear's [out, in])
    w_up = jax.random.normal(ku, (hidden, intermediate), dtype=jnp.float32) * 0.05
    b_up = jax.random.normal(kbu, (intermediate,), dtype=jnp.float32) * 0.05
    w_down = jax.random.normal(kd, (intermediate, hidden), dtype=jnp.float32) * 0.05
    b_down = jax.random.normal(kbd, (hidden,), dtype=jnp.float32) * 0.05

    ref = bert_mlp_ref(x, w_up, b_up, w_down, b_down)

    # f32, auto plan (resident single-buffered weights, ragged token grid).
    out = jax.block_until_ready(bert_mlp_pallas(x, w_up, b_up, w_down, b_down))
    assert out.shape == (T, hidden)
    assert jnp.allclose(out.astype(jnp.float32), ref, atol=1e-4, rtol=1e-4), \
        "f32 mismatch vs reference"

    # bf16 path (native-dtype MXU operands, f32 accumulation).
    out_bf16 = jax.block_until_ready(bert_mlp_pallas(
        x.astype(jnp.bfloat16),
        w_up.astype(jnp.bfloat16), b_up.astype(jnp.bfloat16),
        w_down.astype(jnp.bfloat16), b_down.astype(jnp.bfloat16)))
    assert out_bf16.shape == (T, hidden)
    assert jnp.allclose(out_bf16.astype(jnp.float32), ref, atol=5e-2, rtol=5e-2), \
        "bf16 mismatch vs reference"

    # Streamed (I-tiled accumulator) plan with a larger intermediate so the
    # "arbitrary" grid axis takes >1 step.
    I2 = 256
    w_up_s = jax.random.normal(ku2, (hidden, I2), dtype=jnp.float32) * 0.05
    b_up_s = jax.random.normal(kbu2, (I2,), dtype=jnp.float32) * 0.05
    w_down_s = jax.random.normal(kd2, (I2, hidden), dtype=jnp.float32) * 0.05
    b_down_s = jax.random.normal(kbd2, (hidden,), dtype=jnp.float32) * 0.05
    ref_s = bert_mlp_ref(x, w_up_s, b_up_s, w_down_s, b_down_s)
    out_s = jax.block_until_ready(bert_mlp_pallas(
        x, w_up_s, b_up_s, w_down_s, b_down_s, plan="streamed", tI=128))
    assert out_s.shape == (T, hidden)
    assert jnp.allclose(out_s.astype(jnp.float32), ref_s, atol=1e-4, rtol=1e-4), \
        "streamed-plan mismatch vs reference"

    print("KERNEL_OK")
</pallas_src>

<mosaic_0001>
module attributes {stable_mosaic.version = 11 : i64} {
  func.func @kernel(%arg0: i32, %arg1: memref<8x32xf32, #tpu.memory_space<vmem>>, %arg2: memref<32x64xf32, #tpu.memory_space<vmem>>, %arg3: memref<1x64xf32, #tpu.memory_space<vmem>>, %arg4: memref<64x32xf32, #tpu.memory_space<vmem>>, %arg5: memref<1x32xf32, #tpu.memory_space<vmem>>, %arg6: memref<8x32xf32, #tpu.memory_space<vmem>>) attributes {dimension_semantics = [#tpu.dimension_semantics<parallel>], iteration_bounds = array<i64: 2>, scalar_prefetch = 0 : i64, scratch_operands = 0 : i64, tpu.core_type = #tpu.core_type<tc>, window_params = [{transform_indices = @transform_0, window_bounds = array<i64: 8, 32>}, {pipeline_mode = #tpu.pipeline_mode<synchronous>, transform_indices = @transform_1, window_bounds = array<i64: 32, 64>}, {pipeline_mode = #tpu.pipeline_mode<synchronous>, transform_indices = @transform_2, window_bounds = array<i64: 1, 64>}, {pipeline_mode = #tpu.pipeline_mode<synchronous>, transform_indices = @transform_3, window_bounds = array<i64: 64, 32>}, {pipeline_mode = #tpu.pipeline_mode<synchronous>, transform_indices = @transform_4, window_bounds = array<i64: 1, 32>}, {transform_indices = @transform_5, window_bounds = array<i64: 8, 32>}]} {
    %c0 = arith.constant 0 : index
    %c0_0 = arith.constant 0 : index
    %0 = vector.load %arg1[%c0, %c0_0] : memref<8x32xf32, #tpu.memory_space<vmem>>, vector<8x32xf32>
    %cst = arith.constant 0.000000e+00 : f32
    %1 = vector.broadcast %cst : f32 to vector<8x32xf32>
    %c0_1 = arith.constant 0 : index
    %c0_2 = arith.constant 0 : index
    %2 = vector.load %arg2[%c0_1, %c0_2] : memref<32x64xf32, #tpu.memory_space<vmem>>, vector<32x64xf32>
    %cst_3 = arith.constant dense<0.000000e+00> : vector<8x64xf32>
    %3 = tpu.matmul %0, %2, %cst_3 {dimension_numbers = #tpu.dot_dimension_numbers<[1], [0], [0], [1], [0, 0, 1, 1], [], []>} : vector<8x32xf32>, vector<32x64xf32>, vector<8x64xf32> -> vector<8x64xf32>
    %c0_4 = arith.constant 0 : index
    %c0_5 = arith.constant 0 : index
    %4 = vector.load %arg3[%c0_4, %c0_5] : memref<1x64xf32, #tpu.memory_space<vmem>>, vector<1x64xf32>
    %5 = vector.broadcast %4 : vector<1x64xf32> to vector<8x64xf32>
    %6 = arith.addf %3, %5 : vector<8x64xf32>
    %cst_6 = arith.constant 5.000000e-01 : f32
    %7 = vector.broadcast %cst_6 : f32 to vector<8x64xf32>
    %8 = arith.mulf %7, %6 : vector<8x64xf32>
    %cst_7 = arith.constant 0.707106769 : f32
    %9 = vector.broadcast %cst_7 : f32 to vector<8x64xf32>
    %10 = arith.mulf %6, %9 : vector<8x64xf32>
    %11 = math.erf %10 : vector<8x64xf32>
    %cst_8 = arith.constant 1.000000e+00 : f32
    %12 = vector.broadcast %cst_8 : f32 to vector<8x64xf32>
    %13 = arith.addf %12, %11 : vector<8x64xf32>
    %14 = arith.mulf %8, %13 : vector<8x64xf32>
    %c0_9 = arith.constant 0 : index
    %c0_10 = arith.constant 0 : index
    %15 = vector.load %arg4[%c0_9, %c0_10] : memref<64x32xf32, #tpu.memory_space<vmem>>, vector<64x32xf32>
    %cst_11 = arith.constant dense<0.000000e+00> : vector<8x32xf32>
    %16 = tpu.matmul %14, %15, %cst_11 {dimension_numbers = #tpu.dot_dimension_numbers<[1], [0], [0], [1], [0, 0, 1, 1], [], []>} : vector<8x64xf32>, vector<64x32xf32>, vector<8x32xf32> -> vector<8x32xf32>
    %17 = arith.addf %1, %16 : vector<8x32xf32>
    %c0_12 = arith.constant 0 : index
    %c0_13 = arith.constant 0 : index
    %18 = vector.load %arg5[%c0_12, %c0_13] : memref<1x32xf32, #tpu.memory_space<vmem>>, vector<1x32xf32>
    %19 = vector.broadcast %18 : vector<1x32xf32> to vector<8x32xf32>
    %20 = arith.addf %17, %19 : vector<8x32xf32>
    %c0_14 = arith.constant 0 : index
    %c0_15 = arith.constant 0 : index
    %21 = vector.load %arg6[%c0_14, %c0_15] : memref<8x32xf32, #tpu.memory_space<vmem>>, vector<8x32xf32>
    tpu.vector_store %arg6[%c0_14, %c0_15], %20 {strides = array<i32>} : memref<8x32xf32, #tpu.memory_space<vmem>>, vector<8x32xf32>,
    return
  }
  func.func @transform_0(%arg0: i32) -> (i32, i32) {
    %c0_i32 = arith.constant 0 : i32
    %c0_i32_0 = arith.constant 0 : i32
    return %arg0, %c0_i32 : i32, i32
  }
  func.func @transform_1(%arg0: i32) -> (i32, i32) {
    %c0_i32 = arith.constant 0 : i32
    %c0_i32_0 = arith.constant 0 : i32
    %c0_i32_1 = arith.constant 0 : i32
    return %c0_i32, %c0_i32_0 : i32, i32
  }
  func.func @transform_2(%arg0: i32) -> (i32, i32) {
    %c0_i32 = arith.constant 0 : i32
    %c0_i32_0 = arith.constant 0 : i32
    %c0_i32_1 = arith.constant 0 : i32
    return %c0_i32, %c0_i32_0 : i32, i32
  }
  func.func @transform_3(%arg0: i32) -> (i32, i32) {
    %c0_i32 = arith.constant 0 : i32
    %c0_i32_0 = arith.constant 0 : i32
    %c0_i32_1 = arith.constant 0 : i32
    return %c0_i32, %c0_i32_0 : i32, i32
  }
  func.func @transform_4(%arg0: i32) -> (i32, i32) {
    %c0_i32 = arith.constant 0 : i32
    %c0_i32_0 = arith.constant 0 : i32
    %c0_i32_1 = arith.constant 0 : i32
    return %c0_i32, %c0_i32_0 : i32, i32
  }
  func.func @transform_5(%arg0: i32) -> (i32, i32) {
    %c0_i32 = arith.constant 0 : i32
    %c0_i32_0 = arith.constant 0 : i32
    return %arg0, %c0_i32 : i32, i32
  }
}

</mosaic_0001>

<llo_original>
// kernel: tpu_custom_call.1
$region0: #{tpu_custom_call.1}
  #allocation0 [shape = 'u32[]', space=smem, size = 0x4, offset = 0x4, fixed_abs, tag = 'smem constant byte address 0x4 - core index']
  #allocation1 [shape = 'u32[72,128]{1,0:T(1,128)}', space=vmem, size = 0x9000, scoped, tag = 'internal scratch']
  %s0 = inlined_call_operand.vmem [shape: f32[16,32], index: 0, kind: input, shape index: {}]
  %s1 = inlined_call_operand.vmem [shape: f32[32,64], index: 1, kind: input, shape index: {}]
  %s2 = inlined_call_operand.vmem [shape: f32[1,64], index: 2, kind: input, shape index: {}]
  %s3 = inlined_call_operand.vmem [shape: f32[64,32], index: 3, kind: input, shape index: {}]
  %s4 = inlined_call_operand.vmem [shape: f32[1,32], index: 4, kind: input, shape index: {}]
  %s5 = inlined_call_operand.hbm [shape: f32[16,32], index: 5, kind: output, shape index: {}]
  %s6 = sld [smem:[#allocation0]]
  $region53: #{tpu_custom_call.1} parent=0
    _
  %s8 = ssub.s32 1, %s6
  %s9 = scalar_select 0, %s8, %s6
  $region1: #{tpu_custom_call.1} parent=0
    #allocation2 [shape = 'u8[8192]{0}', space=vmem, size = 0x2000, scoped, tag = 'output window, operand 0']
    #allocation3 [shape = 's32[2]{0}', space=sflag, size = 0x8, scoped, tag = 'scoped memory for tpu_custom_call.1']
    %10 = vsyncpa [#allocation3], 0
    %s11 = scalar_lea.sflag [#allocation3], 1
    %12 = vsyncpa %s11, 0
    loop: start=0, step=1, limit=4
    $region2: #{tpu_custom_call.1} parent=1 // loop_pre_header
      _
    $region3: #{tpu_custom_call.1} parent=1 // loop_header
      %s14 = sphi 0, %s18
      %p15 = scmp.ge.s32.totalorder %s14, 4
      %s24 = sphi 0, %s26
      %s27 = sphi 0, %s24
      %s28 = sphi 0, %s27
      %s44 = sphi 0, %s28
      %s48 = sphi 0, %s48
      %s50 = sphi 0, %s48
      %s51 = sphi 0, %s50
      %s65 = sphi 0, %s51
      %s69 = sphi 0, %s69
      %s71 = sphi 0, %s69
      %s72 = sphi 0, %s71
      %s86 = sphi 0, %s72
      %s90 = sphi 0, %s90
      %s92 = sphi 0, %s90
      %s93 = sphi 0, %s92
      %s107 = sphi 0, %s93
      %s111 = sphi 0, %s111
      %s113 = sphi 0, %s111
      %s114 = sphi 0, %s113
      %s128 = sphi 0, %s114
      %s134 = sphi 0, %s136
      %s137 = sphi 0, %s134
      %s138 = sphi 0, %s137
      %s154 = sphi 0, %s138
    $region4: #{tpu_custom_call.1} parent=1 // loop_header_branch
      %17 = sbr.rel (%p15) target = $region8
    $region5: #{tpu_custom_call.1} parent=1 // loop_body
      %s19 = ssub.s32 %s14, 1
      %s20 = ssub.s32 %s14, 2
      %s21 = sadd.s32 %s14, 1
      %s22 = ssub.s32 %s14, %s21
      %p23 = scmp.eq.s32.totalorder %s22, 0
      %s25 = sadd.s32 %s24, 1
      %s26 = scalar_select %p23, %s24, %s25
      %p29 = pneg %p23
      %p30 = scmp.eq.s32.totalorder %s14, 1
      %p31 = por %p29, %p30
      %p32 = scmp.ne.s32.totalorder %s24, %s27
      %p33 = scmp.eq.s32.totalorder %s14, 0
      %p34 = por %p32, %p33
      %p35 = scmp.ne.s32.totalorder %s24, %s27
      %p36 = scmp.eq.s32.totalorder %s19, 1
      %p37 = por %p35, %p36
      %p38 = scmp.ne.s32.totalorder %s27, %s28
      %p39 = scmp.eq.s32.totalorder %s19, 0
      %p40 = por %p38, %p39
      %p41 = scmp.ne.s32.totalorder %s27, %s28
      %p42 = scmp.eq.s32.totalorder %s20, 1
      %p43 = por %p41, %p42
      %p45 = scmp.ne.s32.totalorder %s28, %s44
      %p46 = scmp.eq.s32.totalorder %s20, 0
      %p47 = por %p45, %p46
      %s49 = sadd.s32 %s48, 1
      %p52 = scmp.eq.s32.totalorder %s14, 1
      %p53 = scmp.ne.s32.totalorder %s48, %s50
      %p54 = scmp.eq.s32.totalorder %s14, 0
      %p55 = por %p53, %p54
      %p56 = scmp.ne.s32.totalorder %s48, %s50
      %p57 = scmp.eq.s32.totalorder %s19, 1
      %p58 = por %p56, %p57
      %p59 = scmp.ne.s32.totalorder %s50, %s51
      %p60 = scmp.eq.s32.totalorder %s19, 0
      %p61 = por %p59, %p60
      %p62 = scmp.ne.s32.totalorder %s50, %s51
      %p63 = scmp.eq.s32.totalorder %s20, 1
      %p64 = por %p62, %p63
      %p66 = scmp.ne.s32.totalorder %s51, %s65
      %p67 = scmp.eq.s32.totalorder %s20, 0
      %p68 = por %p66, %p67
      %s70 = sadd.s32 %s69, 1
      %p73 = scmp.eq.s32.totalorder %s14, 1
      %p74 = scmp.ne.s32.totalorder %s69, %s71
      %p75 = scmp.eq.s32.totalorder %s14, 0
      %p76 = por %p74, %p75
      %p77 = scmp.ne.s32.totalorder %s69, %s71
      %p78 = scmp.eq.s32.totalorder %s19, 1
      %p79 = por %p77, %p78
      %p80 = scmp.ne.s32.totalorder %s71, %s72
      %p81 = scmp.eq.s32.totalorder %s19, 0
      %p82 = por %p80, %p81
      %p83 = scmp.ne.s32.totalorder %s71, %s72
      %p84 = scmp.eq.s32.totalorder %s20, 1
      %p85 = por %p83, %p84
      %p87 = scmp.ne.s32.totalorder %s72, %s86
      %p88 = scmp.eq.s32.totalorder %s20, 0
      %p89 = por %p87, %p88
      %s91 = sadd.s32 %s90, 1
      %p94 = scmp.eq.s32.totalorder %s14, 1
      %p95 = scmp.ne.s32.totalorder %s90, %s92
      %p96 = scmp.eq.s32.totalorder %s14, 0
      %p97 = por %p95, %p96
      %p98 = scmp.ne.s32.totalorder %s90, %s92
      %p99 = scmp.eq.s32.totalorder %s19, 1
      %p100 = por %p98, %p99
      %p101 = scmp.ne.s32.totalorder %s92, %s93
      %p102 = scmp.eq.s32.totalorder %s19, 0
      %p103 = por %p101, %p102
      %p104 = scmp.ne.s32.totalorder %s92, %s93
      %p105 = scmp.eq.s32.totalorder %s20, 1
      %p106 = por %p104, %p105
      %p108 = scmp.ne.s32.totalorder %s93, %s107
      %p109 = scmp.eq.s32.totalorder %s20, 0
      %p110 = por %p108, %p109
      %s112 = sadd.s32 %s111, 1
      %p115 = scmp.eq.s32.totalorder %s14, 1
      %p116 = scmp.ne.s32.totalorder %s111, %s113
      %p117 = scmp.eq.s32.totalorder %s14, 0
      %p118 = por %p116, %p117
      %p119 = scmp.ne.s32.totalorder %s111, %s113
      %p120 = scmp.eq.s32.totalorder %s19, 1
      %p121 = por %p119, %p120
      %p122 = scmp.ne.s32.totalorder %s113, %s114
      %p123 = scmp.eq.s32.totalorder %s19, 0
      %p124 = por %p122, %p123
      %p125 = scmp.ne.s32.totalorder %s113, %s114
      %p126 = scmp.eq.s32.totalorder %s20, 1
      %p127 = por %p125, %p126
      %p129 = scmp.ne.s32.totalorder %s114, %s128
      %p130 = scmp.eq.s32.totalorder %s20, 0
      %p131 = por %p129, %p130
      %s132 = ssub.s32 %s14, %s21
      %p133 = scmp.eq.s32.totalorder %s132, 0
      %s135 = sadd.s32 %s134, 1
      %s136 = scalar_select %p133, %s134, %s135
      %p139 = pneg %p133
      %p140 = scmp.eq.s32.totalorder %s14, 1
      %p141 = por %p139, %p140
      %p142 = scmp.ne.s32.totalorder %s134, %s137
      %p143 = scmp.eq.s32.totalorder %s14, 0
      %p144 = por %p142, %p143
      %p145 = scmp.ne.s32.totalorder %s134, %s137
      %p146 = scmp.eq.s32.totalorder %s19, 1
      %p147 = por %p145, %p146
      %p148 = scmp.ne.s32.totalorder %s137, %s138
      %p149 = scmp.eq.s32.totalorder %s19, 0
      %p150 = por %p148, %p149
      %p151 = scmp.ne.s32.totalorder %s137, %s138
      %p152 = scmp.eq.s32.totalorder %s20, 1
      %p153 = por %p151, %p152
      %p155 = scmp.ne.s32.totalorder %s138, %s154
      %p156 = scmp.eq.s32.totalorder %s20, 0
      %p157 = por %p155, %p156
      %p158 = scmp.le.s32.totalorder 1, %s14
      %p159 = scmp.lt.s32.totalorder %s14, 3
      %p160 = pnand %p158, %p159
      %p161 = pneg %p160
      // Predicated region
      $region9: #{tpu_custom_call.1} parent=5 // pred_check
        _
      $region10: #{tpu_custom_call.1} parent=5 // pred_check_branch
        %163 = sbr.rel (%p160) target = $region12
      $region11: #{tpu_custom_call.1} parent=5 // pred_region
        %s164 = ssub.s32 %s14, 1
        // Predicated region
        $region13: #{tpu_custom_call.1} parent=11 // pred_check
          %p165 = pneg %p61
        $region14: #{tpu_custom_call.1} parent=11 // pred_check_branch
          %167 = sbr.rel (%p165) target = $region16
        $region15: #{tpu_custom_call.1} parent=11 // pred_region
          _
        $region16: #{tpu_custom_call.1} parent=11 // pred_fallthru
          _
        // Predicated region
        $region17: #{tpu_custom_call.1} parent=11 // pred_check
          %p168 = pneg %p82
        $region18: #{tpu_custom_call.1} parent=11 // pred_check_branch
          %170 = sbr.rel (%p168) target = $region20
        $region19: #{tpu_custom_call.1} parent=11 // pred_region
          _
        $region20: #{tpu_custom_call.1} parent=11 // pred_fallthru
          _
        // Predicated region
        $region21: #{tpu_custom_call.1} parent=11 // pred_check
          %p171 = pneg %p103
        $region22: #{tpu_custom_call.1} parent=11 // pred_check_branch
          %173 = sbr.rel (%p171) target = $region24
        $region23: #{tpu_custom_call.1} parent=11 // pred_region
          _
        $region24: #{tpu_custom_call.1} parent=11 // pred_fallthru
          _
        // Predicated region
        $region25: #{tpu_custom_call.1} parent=11 // pred_check
          %p174 = pneg %p124
        $region26: #{tpu_custom_call.1} parent=11 // pred_check_branch
          %176 = sbr.rel (%p174) target = $region28
        $region27: #{tpu_custom_call.1} parent=11 // pred_region
          _
        $region28: #{tpu_custom_call.1} parent=11 // pred_fallthru
          _
      $region12: #{tpu_custom_call.1} parent=5 // pred_fallthru
        _
      %p177 = scmp.lt.s32.totalorder %s14, 2
      // Predicated region
      $region29: #{tpu_custom_call.1} parent=5 // pred_check
        %p178 = pneg %p177
      $region30: #{tpu_custom_call.1} parent=5 // pred_check_branch
        %180 = sbr.rel (%p178) target = $region32
      $region31: #{tpu_custom_call.1} parent=5 // pred_region
        // Predicated region
        $region33: #{tpu_custom_call.1} parent=31 // pred_check
          %p181 = pneg %p34
        $region34: #{tpu_custom_call.1} parent=31 // pred_check_branch
          %183 = sbr.rel (%p181) target = $region36
        $region35: #{tpu_custom_call.1} parent=31 // pred_region
          %p184 = scmp.lt.s32.totalorder %s14, 1
          %s185 = scalar_select %p184, %s14, 1
          %s186 = smul.addr %s185, 8
          %s187 = scalar_lea.vmem %s0, %s186
        $region36: #{tpu_custom_call.1} parent=31 // pred_fallthru
          _
      $region32: #{tpu_custom_call.1} parent=5 // pred_fallthru
        _
      %p188 = scmp.le.s32.totalorder 1, %s14
      %p189 = scmp.lt.s32.totalorder %s14, 3
      %p190 = pnand %p188, %p189
      %p191 = pneg %p190
      // Predicated region
      $region37: #{tpu_custom_call.1} parent=5 // pred_check
        _
      $region38: #{tpu_custom_call.1} parent=5 // pred_check_branch
        %193 = sbr.rel (%p190) target = $region40
      $region39: #{tpu_custom_call.1} parent=5 // pred_region
        %s194 = ssub.s32 %s14, 1
        %p195 = scmp.lt.s32.totalorder %s19, 1
        %s196 = scalar_select %p195, %s19, 1
        %s197 = smul.addr %s196, 8
        %s198 = scalar_lea.vmem %s0, %s197
        %p199 = pneg %p40
        %p200 = pneg %p37
        %p201 = pneg %p61
        %p202 = pneg %p58
        %p203 = pneg %p82
        %p204 = pneg %p79
        %p205 = pneg %p103
        %p206 = pneg %p100
        %p207 = pneg %p124
        %p208 = pneg %p121
        %p209 = pneg %p150
        %p210 = pneg %p147
        %s211 = sand.u32 %s137, 1
        %s212 = scalar_lea.sflag [#allocation3], %s211
        %s213 = sand.u32 %s137, 1
        %s214 = smul.addr %s213, 8
        %s215 = scalar_lea.vmem [#allocation2], %s214
        %p216 = scmp.lt.s32.totalorder %s19, 1
        %s217 = scalar_select %p216, %s19, 1
        %s218 = smul.addr %s217, 8
        %s219 = scalar_lea.vmem %s0, %s218
        %v220 = vld [vmem:[%s219] sm:$0xff]
        %v221 = vld [vmem:[%s1] sm:$0xff]
        %v222 = vld [vmem:[%s1 + $0x8] sm:$0xff]
        %v223 = vld [vmem:[%s1 + $0x10] sm:$0xff]
        %v224 = vld [vmem:[%s1 + $0x18] sm:$0xff]
        %v225 = vld [vmem:[%s2] sm:$0x1]
        %v227 = vperm.slane %v225, 0
        %vm229 = vcmask 261120
        %v231 = vsel %vm229, %v220, 0
        %233 = vmatpush.msra.mxu0 0.0
        %234 = vmatpush.msra.mxu0 0.0
        %235 = vmatpush.msra.mxu0 0.0
        %236 = vmatpush.msra.mxu0 0.0
        %237 = vmatpush.msra.mxu0 0.0
        %238 = vmatpush.msra.mxu0 0.0
        %239 = vmatpush.msra.mxu0 0.0
        %240 = vmatpush.msra.mxu0 0.0
        %241 = vmatpush.msra.mxu0 0.0
        %242 = vmatpush.msra.mxu0 0.0
        %243 = vmatpush.msra.mxu0 0.0
        %244 = vmatpush.msra.mxu0 0.0
        %245 = vmatpush.msra.mxu0 %v224
        %246 = vmatpush.msra.mxu0 %v223
        %247 = vmatpush.msra.mxu0 %v222
        %248 = vmatpush.msra.mxu0 %v221
        %249 = vmatmul.f32.gmra.mxu0 %v231
        %v250 = vpop.f32.mrf.mxu0
        %v251 = vadd.f32 %v227, %v250
        %252 = vdwg.mxu0
        %v253 = vmul.f32 %v251, 0.5
        %v254 = vmul.f32 %v251, 0.70710677
        %v255 = vmul.f32 %v254, %v254
        %v256 = vmin.f32 16.0, %v255
        %v257 = vmul.f32 %v256, 2.1237322e-06
        %v258 = vadd.f32 %v257, 0.00028619796
        %v259 = vmul.f32 %v256, %v258
        %v260 = vadd.f32 %v259, 0.0036580483
        %v261 = vmul.f32 %v256, %v260
        %v262 = vadd.f32 %v261, 0.05243302
        %v263 = vmul.f32 %v256, %v262
        %v264 = vadd.f32 %v263, 0.18741608
        %v265 = vmul.f32 %v256, %v264
        %v266 = vadd.f32 %v265, 1.1283791
        %v267 = vmul.f32 %v254, %v266
        %v268 = vmul.f32 %v256, 3.8918573e-05
        %v269 = vadd.f32 %v268, 0.001143296
        %v270 = vmul.f32 %v256, %v269
        %v271 = vadd.f32 %v270, 0.014752088
        %v272 = vmul.f32 %v256, %v271
        %v273 = vadd.f32 %v272, 0.112945676
        %v274 = vmul.f32 %v256, %v273
        %v275 = vadd.f32 %v274, 0.4994258
        %v276 = vmul.f32 %v256, %v275
        %v277 = vadd.f32 %v276, 1.0
        %v278 = vrcp.pop %v277
        %v279 = vmul.f32 %v277, %v278
        %v280 = vsub.f32 1.0, %v279
        %v281 = vmul.f32 %v278, %v280
        %v282 = vadd.f32 %v278, %v281
        %vm283 = vweird.f32 %v277
        %vm284 = vweird.f32 %v278
        %vm285 = vmor %vm283, %vm284
        %v286 = vsel %vm285, %v278, %v282
        %v287 = vand.u32 2147483647, %v277
        %vm288 = vcmp.eq.f32.partialorder %v287, 8.507059e+37
        %v289 = vand.u32 %v277, 2147483648
        %v290 = vor.u32 1.1754944e-38, %v289
        %v291 = vsel %vm288, %v290, %v286
        %v292 = vmul.f32 %v267, %v291
        %v293 = vmin.f32 %v292, 1.0
        %v294 = vmax.f32 %v293, -1.0
        %v295 = vadd.f32 %v294, 1.0
        %v296 = vmul.f32 %v253, %v295
        %v297 = vld [vmem:[%s3] sm:$0xff]
        %v298 = vld [vmem:[%s3 + $0x8] sm:$0xff]
        %v299 = vld [vmem:[%s3 + $0x10] sm:$0xff]
        %v300 = vld [vmem:[%s3 + $0x18] sm:$0xff]
        %v301 = vld [vmem:[%s3 + $0x20] sm:$0xff]
        %v302 = vld [vmem:[%s3 + $0x28] sm:$0xff]
        %v303 = vld [vmem:[%s3 + $0x30] sm:$0xff]
        %v304 = vld [vmem:[%s3 + $0x38] sm:$0xff]
        %v305 = vld [vmem:[%s4] sm:$0x1]
        %v307 = vperm.slane %v305, 0
        %vm309 = vcmask 523264
        %v311 = vsel %vm309, %v296, 0
        %313 = vmatpush.msra.mxu0 0.0
        %314 = vmatpush.msra.mxu0 0.0
        %315 = vmatpush.msra.mxu0 0.0
        %316 = vmatpush.msra.mxu0 0.0
        %317 = vmatpush.msra.mxu0 0.0
        %318 = vmatpush.msra.mxu0 0.0
        %319 = vmatpush.msra.mxu0 0.0
        %320 = vmatpush.msra.mxu0 0.0
        %321 = vmatpush.msra.mxu0 %v304
        %322 = vmatpush.msra.mxu0 %v303
        %323 = vmatpush.msra.mxu0 %v302
        %324 = vmatpush.msra.mxu0 %v301
        %325 = vmatpush.msra.mxu0 %v300
        %326 = vmatpush.msra.mxu0 %v299
        %327 = vmatpush.msra.mxu0 %v298
        %328 = vmatpush.msra.mxu0 %v297
        %329 = vmatmul.f32.gmra.mxu0 %v311
        %v330 = vpop.f32.mrf.mxu0
        %v331 = vadd.f32 %v307, %v330
        %332 = vdwg.mxu0
        %333 = vst.msk [vmem:[%s215] sm:$0xff] %vm229, %v331
        %s334 = sand.u32 %s137, 1
        %s335 = scalar_lea.sflag [#allocation3], %s334
        %s336 = sand.u32 %s137, 1
        %s337 = smul.addr %s336, 8
        %s338 = scalar_lea.vmem [#allocation2], %s337
        // Predicated region
        $region41: #{tpu_custom_call.1} parent=39 // pred_check
          %p339 = pneg %p147
        $region42: #{tpu_custom_call.1} parent=39 // pred_check_branch
          %341 = sbr.rel (%p339) target = $region44
        $region43: #{tpu_custom_call.1} parent=39 // pred_region
          %343 = vsyncadd %s335, 0
          %s344 = smul.addr %s19, 8
          %s345 = scalar_lea.hbm %s5, %s344
          %s347 = sshll.u32 %s338, 4
          %s348 = int_to_ptr.vmem [resolvable:$true] %s347
          %s349 = sshll.u32 %s345, 4
          %s350 = int_to_ptr.hbm [resolvable:$true] %s349
          %352 = dma.vmem_to_hbm [thread:$0]  %s348, 128, %s350, %s335
        $region44: #{tpu_custom_call.1} parent=39 // pred_fallthru
          _
      $region40: #{tpu_custom_call.1} parent=5 // pred_fallthru
        _
      %p353 = scmp.le.s32.totalorder 2, %s14
      // Predicated region
      $region45: #{tpu_custom_call.1} parent=5 // pred_check
        %p354 = pneg %p353
      $region46: #{tpu_custom_call.1} parent=5 // pred_check_branch
        %356 = sbr.rel (%p354) target = $region48
      $region47: #{tpu_custom_call.1} parent=5 // pred_region
        %s357 = ssub.s32 %s14, 2
        // Predicated region
        $region49: #{tpu_custom_call.1} parent=47 // pred_check
          %p358 = pneg %p153
        $region50: #{tpu_custom_call.1} parent=47 // pred_check_branch
          %360 = sbr.rel (%p358) target = $region52
        $region51: #{tpu_custom_call.1} parent=47 // pred_region
          %s361 = sand.u32 %s138, 1
          %s362 = scalar_lea.sflag [#allocation3], %s361
          %s363 = sand.u32 %s138, 1
          %s364 = smul.addr %s363, 8
          %s365 = scalar_lea.vmem [#allocation2], %s364
          %367 = dma.done %s362, 128
        $region52: #{tpu_custom_call.1} parent=47 // pred_fallthru
          _
      $region48: #{tpu_custom_call.1} parent=5 // pred_fallthru
        _
    $region6: #{tpu_custom_call.1} parent=1 // loop_footer
      %s18 = sadd.s32 1, %s14
    $region7: #{tpu_custom_call.1} parent=1 // loop_footer_branch
      %13 = sbr.rel target = $region3
    $region8: #{tpu_custom_call.1} parent=1 // loop_exit
      _
    %368 = vsyncpa [#allocation3], 1
    %s369 = scalar_lea.sflag [#allocation3], 1
    %370 = vsyncpa %s369, 1

</llo_original>
